<compile_context>
chip_gen: v7x
topology: tpu7x:2x2x1
jax: 0.10.0
libtpu: 0.0.40
codegen_flags: <defaults>
</compile_context>

<pallas_src>
import jax
import jax.numpy as jnp
from jax.experimental import pallas as pl
from jax.experimental.pallas import tpu as pltpu

LANE = 128       # vreg lane width
SUBLANE = 8      # vreg sublane count
MAX_TB = 1024    # max batch-tile rows (sweepable: 256/512/1024)
PAD_NEG = -1e30  # padded-logit bias (exp underflows to exactly 0 in f32)


# ----------------------------------------------------------------------------
# Minimal stand-ins for gym's action spaces (only what the module inspects).
# ----------------------------------------------------------------------------
class Discrete:
    def __init__(self, n):
        self.n = n


class Box:
    def __init__(self, shape):
        self.shape = shape


def _round_up(x, m):
    return (x + m - 1) // m * m


def _next_pow2(x):
    return 1 if x <= 1 else 1 << (x - 1).bit_length()


# ----------------------------------------------------------------------------
# Pallas kernels
# ----------------------------------------------------------------------------
def _encode(x, enc_refs, num_enc):
    """Shared encoder: num_enc x (Linear -> tanh). Padded hidden cols stay 0."""
    for i in range(num_enc):
        w = enc_refs[2 * i][...]
        b = enc_refs[2 * i + 1][...]
        x = jnp.tanh(jnp.dot(x, w, preferred_element_type=jnp.float32) + b)
    return x


def _make_discrete_kernel(num_enc):
    def kernel(*refs):
        # refs = obs, (W,b)*num_enc, Wd, bd, out
        obs_ref = refs[0]
        enc_refs = refs[1:1 + 2 * num_enc]
        wd_ref = refs[1 + 2 * num_enc]
        bd_ref = refs[2 + 2 * num_enc]
        out_ref = refs[-1]
        n = out_ref.shape[1]  # real action count (output is real-width)

        x = _encode(obs_ref[...], enc_refs, num_enc)
        # Lane-dense (tb, n_pad) logits; padded columns carry bias -1e30 so
        # exp(pad - m) == 0 exactly -> max/sum are over real columns only.
        logits = jnp.dot(x, wd_ref[...], preferred_element_type=jnp.float32) + bd_ref[...]
        m = jnp.max(logits, axis=1, keepdims=True)
        s = jnp.sum(jnp.exp(logits - m), axis=1, keepdims=True)
        out_ref[...] = (logits - m - jnp.log(s))[:, :n]

    return kernel


def _make_box_kernel(num_enc, a_pad):
    def kernel(*refs):
        # refs = obs, (W,b)*num_enc, W_head(=[Wmu|Wstd]), b_head, mu_out, std_out
        obs_ref = refs[0]
        enc_refs = refs[1:1 + 2 * num_enc]
        wh_ref = refs[1 + 2 * num_enc]
        bh_ref = refs[2 + 2 * num_enc]
        mu_ref, std_ref = refs[-2], refs[-1]
        adim = mu_ref.shape[1]

        x = _encode(obs_ref[...], enc_refs, num_enc)
        # Single fused matmul for both heads -> one lane-dense (tb, 2*a_pad) slab.
        h = jnp.dot(x, wh_ref[...], preferred_element_type=jnp.float32) + bh_ref[...]
        t = jnp.tanh(h)
        mu_full = 2.0 * t[:, :a_pad]                         # mu  = 2*tanh(Linear)
        std_full = jax.nn.softplus(t[:, a_pad:]) + 0.001     # std = softplus(tanh(Linear)) + 1e-3
        mu_ref[...] = mu_full[:, :adim]
        std_ref[...] = std_full[:, :adim]

    return kernel


# ----------------------------------------------------------------------------
# Parameter init (torch.nn.Linear default U(-k, k), k=1/sqrt(fan_in)),
# stored pre-padded to lane-friendly shapes (input dim is NOT padded).
# ----------------------------------------------------------------------------
def _init_linear_padded(key, in_dim, out_dim, in_pad, out_pad, pad_bias_value=0.0):
    kw, kb = jax.random.split(key)
    k = 1.0 / jnp.sqrt(jnp.float32(in_dim))
    w = jax.random.uniform(kw, (in_dim, out_dim), jnp.float32, -k, k)
    b = jax.random.uniform(kb, (1, out_dim), jnp.float32, -k, k)
    w_pad = jnp.zeros((in_pad, out_pad), jnp.float32).at[:in_dim, :out_dim].set(w)
    b_pad = jnp.full((1, out_pad), jnp.float32(pad_bias_value)).at[:, :out_dim].set(b)
    return w_pad, b_pad


class PolicyNetworkPallas:
    def __init__(self, in_dim, action_space, hiddens=(), key=None):
        if key is None:
            key = jax.random.PRNGKey(0)
        self.action_space = action_space
        self.in_dim = in_dim
        layer_dims = [in_dim] + list(hiddens)
        self.layer_dims = layer_dims
        # Input features stay unpadded (obs DMA'd at real width); hidden /
        # head dims are padded to 128 lanes (VMEM-only, keeps matmuls dense).
        self.padded_dims = [in_dim] + [_round_up(d, LANE) for d in hiddens]
        self.num_enc = len(layer_dims) - 1

        keys = jax.random.split(key, self.num_enc + 2)
        params = []
        for i, (di, do) in enumerate(zip(layer_dims, layer_dims[1:])):
            params.extend(
                _init_linear_padded(keys[i], di, do, self.padded_dims[i], self.padded_dims[i + 1])
            )

        h_real = layer_dims[-1]
        h_pad = self.padded_dims[-1]
        if isinstance(action_space, Discrete):
            n = action_space.n
            self.n_pad = _round_up(n, LANE)
            wd, bd = _init_linear_padded(
                keys[-1], h_real, n, h_pad, self.n_pad, pad_bias_value=PAD_NEG
            )
            params.extend([wd, bd])
        elif isinstance(action_space, Box):
            adim = action_space.shape[0]
            self.a_pad = _round_up(adim, LANE)
            wmu, bmu = _init_linear_padded(keys[-2], h_real, adim, h_pad, self.a_pad)
            wstd, bstd = _init_linear_padded(keys[-1], h_real, adim, h_pad, self.a_pad)
            # Fuse mu|std heads: one matmul, one wide lane-dense slab in VMEM.
            params.extend(
                [jnp.concatenate([wmu, wstd], axis=1), jnp.concatenate([bmu, bstd], axis=1)]
            )
        else:
            raise ValueError(f"Unsupported action_space type: {action_space}")

        self.params = tuple(params)
        self._fwd_cache = {}  # batch bucket (power of 2) -> jitted forward

    # ------------------------------------------------------------------
    def _build_forward(self, b_pad):
        """b_pad: power-of-two padded batch (>= SUBLANE)."""
        in_dim = self.in_dim
        if b_pad <= 2 * SUBLANE:
            tb = b_pad                      # tiny batch: single tile
        else:
            # >=2 grid steps so 'parallel' shards across both TCs on v7x;
            # tiles up to 1024 rows amortize the ~0.35us per-step overhead.
            tb = min(MAX_TB, b_pad // 2)
        grid = (b_pad // tb,)

        # obs at real feature width: last block dim == full array dim.
        obs_spec = pl.BlockSpec((tb, in_dim), lambda i: (i, 0))
        # Weights/biases: full-array blocks with a constant index_map so they
        # stay VMEM-resident across all batch tiles (<1 MiB total here; add
        # pipeline_mode=pl.Buffered(1) only if hidden widths ever grow large).
        param_specs = [pl.BlockSpec(p.shape, lambda i: (0, 0)) for p in self.params]

        if isinstance(self.action_space, Discrete):
            n = self.action_space.n
            kernel = _make_discrete_kernel(self.num_enc)
            out_shape = jax.ShapeDtypeStruct((b_pad, n), jnp.float32)
            out_specs = pl.BlockSpec((tb, n), lambda i: (i, 0))
        else:
            adim = self.action_space.shape[0]
            kernel = _make_box_kernel(self.num_enc, self.a_pad)
            out_shape = (jax.ShapeDtypeStruct((b_pad, adim), jnp.float32),
                         jax.ShapeDtypeStruct((b_pad, adim), jnp.float32))
            out_specs = (pl.BlockSpec((tb, adim), lambda i: (i, 0)),
                         pl.BlockSpec((tb, adim), lambda i: (i, 0)))

        call = pl.pallas_call(
            kernel,
            out_shape=out_shape,
            grid=grid,
            in_specs=[obs_spec] + param_specs,
            out_specs=out_specs,
            compiler_params=pltpu.CompilerParams(dimension_semantics=("parallel",)),
        )

        def fwd(obs, *params):
            return call(obs.astype(jnp.float32), *params)

        return jax.jit(fwd)

    # ------------------------------------------------------------------
    def __call__(self, obs):
        batch = obs.shape[0]
        # Bucket batch to the next power of two so varying rollout batch
        # sizes hit a bounded number of compiled variants.
        bucket = max(SUBLANE, _next_pow2(batch))
        fwd = self._fwd_cache.get(bucket)
        if fwd is None:
            fwd = self._build_forward(bucket)
            self._fwd_cache[bucket] = fwd

        if bucket != batch:
            obs = jnp.pad(jnp.asarray(obs), ((0, bucket - batch), (0, 0)))
        out = fwd(obs, *self.params)

        if isinstance(self.action_space, Discrete):
            # TODO(synk): torch.distributions.Categorical has no Pallas
            # equivalent; return the log-probabilities (log_softmax logits).
            return out if bucket == batch else out[:batch]
        # TODO(synk): torch.distributions.Normal has no Pallas equivalent;
        # return its parameters (mu, std).
        mu, std = out
        if bucket != batch:
            mu, std = mu[:batch], std[:batch]
        return mu, std


# ----------------------------------------------------------------------------
# Pure-JAX reference (operates on the un-padded sub-blocks of the parameters)
# ----------------------------------------------------------------------------
def _ref_forward(net, obs):
    x = obs.astype(jnp.float32)
    p = net.params
    dims = net.layer_dims
    for i in range(net.num_enc):
        w = p[2 * i][: dims[i], : dims[i + 1]]
        b = p[2 * i + 1][:, : dims[i + 1]]
        x = jnp.tanh(x @ w + b)
    h = dims[-1]
    if isinstance(net.action_space, Discrete):
        n = net.action_space.n
        wd = p[-2][:h, :n]
        bd = p[-1][:, :n]
        return jax.nn.log_softmax(x @ wd + bd, axis=1)
    else:
        adim = net.action_space.shape[0]
        wh = p[-2][:h]
        bh = p[-1]
        wmu, bmu = wh[:, :adim], bh[:, :adim]
        wstd = wh[:, net.a_pad: net.a_pad + adim]
        bstd = bh[:, net.a_pad: net.a_pad + adim]
        mu = 2.0 * jnp.tanh(x @ wmu + bmu)
        std = jax.nn.softplus(jnp.tanh(x @ wstd + bstd)) + 0.001
        return mu, std


if __name__ == "__main__":
    key = jax.random.PRNGKey(0)
    k_obs, k_obs2, k_net1, k_net2, k_net3 = jax.random.split(key, 5)

    batch, in_dim, hiddens = 8, 16, [32, 32]
    obs = jax.random.normal(k_obs, (batch, in_dim), jnp.float32)

    # --- Discrete action space ---
    net_d = PolicyNetworkPallas(in_dim, Discrete(6), hiddens=hiddens, key=k_net1)
    logp = jax.block_until_ready(net_d(obs))
    logp_ref = _ref_forward(net_d, obs)
    assert logp.shape == (batch, 6)
    assert jnp.allclose(logp, logp_ref, atol=1e-5, rtol=1e-5)
    # second call hits the jitted cache (no rebuild)
    logp2 = jax.block_until_ready(net_d(obs))
    assert jnp.allclose(logp2, logp_ref, atol=1e-5, rtol=1e-5)

    # --- Ragged batch: exercises bucketing (40 -> 64), multi-step grid, pad/slice ---
    obs40 = jax.random.normal(k_obs2, (40, in_dim), jnp.float32)
    logp40 = jax.block_until_ready(net_d(obs40))
    logp40_ref = _ref_forward(net_d, obs40)
    assert logp40.shape == (40, 6)
    assert jnp.allclose(logp40, logp40_ref, atol=1e-5, rtol=1e-5)

    # --- Box action space ---
    net_b = PolicyNetworkPallas(in_dim, Box((4,)), hiddens=hiddens, key=k_net2)
    mu, std = net_b(obs)
    mu = jax.block_until_ready(mu)
    std = jax.block_until_ready(std)
    mu_ref, std_ref = _ref_forward(net_b, obs)
    assert mu.shape == (batch, 4) and std.shape == (batch, 4)
    assert jnp.allclose(mu, mu_ref, atol=1e-5, rtol=1e-5)
    assert jnp.allclose(std, std_ref, atol=1e-5, rtol=1e-5)

    # --- Edge case: no hidden layers (head acts on obs directly) ---
    net_e = PolicyNetworkPallas(in_dim, Discrete(3), hiddens=[], key=k_net3)
    logp_e = jax.block_until_ready(net_e(obs))
    logp_e_ref = _ref_forward(net_e, obs)
    assert jnp.allclose(logp_e, logp_e_ref, atol=1e-5, rtol=1e-5)

    print("KERNEL_OK")
</pallas_src>

<mosaic_0001>
module attributes {stable_mosaic.version = 11 : i64} {
  func.func @kernel(%arg0: i32, %arg1: memref<8x16xf32, #tpu.memory_space<vmem>>, %arg2: memref<16x128xf32, #tpu.memory_space<vmem>>, %arg3: memref<1x128xf32, #tpu.memory_space<vmem>>, %arg4: memref<128x128xf32, #tpu.memory_space<vmem>>, %arg5: memref<1x128xf32, #tpu.memory_space<vmem>>, %arg6: memref<128x128xf32, #tpu.memory_space<vmem>>, %arg7: memref<1x128xf32, #tpu.memory_space<vmem>>, %arg8: memref<8x6xf32, #tpu.memory_space<vmem>>) attributes {dimension_semantics = [#tpu.dimension_semantics<parallel>], iteration_bounds = array<i64: 1>, scalar_prefetch = 0 : i64, scratch_operands = 0 : i64, tpu.core_type = #tpu.core_type<tc>, window_params = [{transform_indices = @transform_0, window_bounds = array<i64: 8, 16>}, {pipeline_mode = #tpu.pipeline_mode<synchronous>, transform_indices = @transform_1, window_bounds = array<i64: 16, 128>}, {pipeline_mode = #tpu.pipeline_mode<synchronous>, transform_indices = @transform_2, window_bounds = array<i64: 1, 128>}, {pipeline_mode = #tpu.pipeline_mode<synchronous>, transform_indices = @transform_3, window_bounds = array<i64: 128, 128>}, {pipeline_mode = #tpu.pipeline_mode<synchronous>, transform_indices = @transform_4, window_bounds = array<i64: 1, 128>}, {pipeline_mode = #tpu.pipeline_mode<synchronous>, transform_indices = @transform_5, window_bounds = array<i64: 128, 128>}, {pipeline_mode = #tpu.pipeline_mode<synchronous>, transform_indices = @transform_6, window_bounds = array<i64: 1, 128>}, {transform_indices = @transform_7, window_bounds = array<i64: 8, 6>}]} {
    %c0 = arith.constant 0 : index
    %c0_0 = arith.constant 0 : index
    %0 = vector.load %arg1[%c0, %c0_0] : memref<8x16xf32, #tpu.memory_space<vmem>>, vector<8x16xf32>
    %c0_1 = arith.constant 0 : index
    %c0_2 = arith.constant 0 : index
    %1 = vector.load %arg2[%c0_1, %c0_2] : memref<16x128xf32, #tpu.memory_space<vmem>>, vector<16x128xf32>
    %c0_3 = arith.constant 0 : index
    %c0_4 = arith.constant 0 : index
    %2 = vector.load %arg3[%c0_3, %c0_4] : memref<1x128xf32, #tpu.memory_space<vmem>>, vector<1x128xf32>
    %cst = arith.constant dense<0.000000e+00> : vector<8x128xf32>
    %3 = tpu.matmul %0, %1, %cst {dimension_numbers = #tpu.dot_dimension_numbers<[1], [0], [0], [1], [0, 0, 1, 1], [], []>} : vector<8x16xf32>, vector<16x128xf32>, vector<8x128xf32> -> vector<8x128xf32>
    %4 = vector.broadcast %2 : vector<1x128xf32> to vector<8x128xf32>
    %5 = arith.addf %3, %4 : vector<8x128xf32>
    %6 = math.tanh %5 : vector<8x128xf32>
    %c0_5 = arith.constant 0 : index
    %c0_6 = arith.constant 0 : index
    %7 = vector.load %arg4[%c0_5, %c0_6] : memref<128x128xf32, #tpu.memory_space<vmem>>, vector<128x128xf32>
    %c0_7 = arith.constant 0 : index
    %c0_8 = arith.constant 0 : index
    %8 = vector.load %arg5[%c0_7, %c0_8] : memref<1x128xf32, #tpu.memory_space<vmem>>, vector<1x128xf32>
    %cst_9 = arith.constant dense<0.000000e+00> : vector<8x128xf32>
    %9 = tpu.matmul %6, %7, %cst_9 {dimension_numbers = #tpu.dot_dimension_numbers<[1], [0], [0], [1], [0, 0, 1, 1], [], []>} : vector<8x128xf32>, vector<128x128xf32>, vector<8x128xf32> -> vector<8x128xf32>
    %10 = vector.broadcast %8 : vector<1x128xf32> to vector<8x128xf32>
    %11 = arith.addf %9, %10 : vector<8x128xf32>
    %12 = math.tanh %11 : vector<8x128xf32>
    %c0_10 = arith.constant 0 : index
    %c0_11 = arith.constant 0 : index
    %13 = vector.load %arg6[%c0_10, %c0_11] : memref<128x128xf32, #tpu.memory_space<vmem>>, vector<128x128xf32>
    %cst_12 = arith.constant dense<0.000000e+00> : vector<8x128xf32>
    %14 = tpu.matmul %12, %13, %cst_12 {dimension_numbers = #tpu.dot_dimension_numbers<[1], [0], [0], [1], [0, 0, 1, 1], [], []>} : vector<8x128xf32>, vector<128x128xf32>, vector<8x128xf32> -> vector<8x128xf32>
    %c0_13 = arith.constant 0 : index
    %c0_14 = arith.constant 0 : index
    %15 = vector.load %arg7[%c0_13, %c0_14] : memref<1x128xf32, #tpu.memory_space<vmem>>, vector<1x128xf32>
    %16 = vector.broadcast %15 : vector<1x128xf32> to vector<8x128xf32>
    %17 = arith.addf %14, %16 : vector<8x128xf32>
    %cst_15 = arith.constant dense<0xFF800000> : vector<8xf32>
    %18 = vector.multi_reduction <maximumf>, %17, %cst_15 [1] : vector<8x128xf32> to vector<8xf32>
    %19 = vector.shape_cast %18 : vector<8xf32> to vector<8x1xf32>
    %20 = vector.broadcast %19 : vector<8x1xf32> to vector<8x128xf32>
    %21 = arith.subf %17, %20 : vector<8x128xf32>
    %22 = math.exp %21 : vector<8x128xf32>
    %cst_16 = arith.constant dense<0.000000e+00> : vector<8xf32>
    %23 = vector.multi_reduction <add>, %22, %cst_16 [1] : vector<8x128xf32> to vector<8xf32>
    %24 = vector.shape_cast %23 : vector<8xf32> to vector<8x1xf32>
    %25 = vector.broadcast %19 : vector<8x1xf32> to vector<8x128xf32>
    %26 = arith.subf %17, %25 : vector<8x128xf32>
    %27 = math.log %24 : vector<8x1xf32>
    %28 = vector.broadcast %27 : vector<8x1xf32> to vector<8x128xf32>
    %29 = arith.subf %26, %28 : vector<8x128xf32>
    %30 = vector.extract_strided_slice %29 {offsets = [0, 0], sizes = [8, 6], strides = [1, 1]} : vector<8x128xf32> to vector<8x6xf32>
    %c0_17 = arith.constant 0 : index
    %c0_18 = arith.constant 0 : index
    %31 = vector.load %arg8[%c0_17, %c0_18] : memref<8x6xf32, #tpu.memory_space<vmem>>, vector<8x6xf32>
    tpu.vector_store %arg8[%c0_17, %c0_18], %30 {strides = array<i32>} : memref<8x6xf32, #tpu.memory_space<vmem>>, vector<8x6xf32>,
    return
  }
  func.func @transform_0(%arg0: i32) -> (i32, i32) {
    %c0_i32 = arith.constant 0 : i32
    %c0_i32_0 = arith.constant 0 : i32
    return %arg0, %c0_i32 : i32, i32
  }
  func.func @transform_1(%arg0: i32) -> (i32, i32) {
    %c0_i32 = arith.constant 0 : i32
    %c0_i32_0 = arith.constant 0 : i32
    %c0_i32_1 = arith.constant 0 : i32
    return %c0_i32, %c0_i32_0 : i32, i32
  }
  func.func @transform_2(%arg0: i32) -> (i32, i32) {
    %c0_i32 = arith.constant 0 : i32
    %c0_i32_0 = arith.constant 0 : i32
    %c0_i32_1 = arith.constant 0 : i32
    return %c0_i32, %c0_i32_0 : i32, i32
  }
  func.func @transform_3(%arg0: i32) -> (i32, i32) {
    %c0_i32 = arith.constant 0 : i32
    %c0_i32_0 = arith.constant 0 : i32
    %c0_i32_1 = arith.constant 0 : i32
    return %c0_i32, %c0_i32_0 : i32, i32
  }
  func.func @transform_4(%arg0: i32) -> (i32, i32) {
    %c0_i32 = arith.constant 0 : i32
    %c0_i32_0 = arith.constant 0 : i32
    %c0_i32_1 = arith.constant 0 : i32
    return %c0_i32, %c0_i32_0 : i32, i32
  }
  func.func @transform_5(%arg0: i32) -> (i32, i32) {
    %c0_i32 = arith.constant 0 : i32
    %c0_i32_0 = arith.constant 0 : i32
    %c0_i32_1 = arith.constant 0 : i32
    return %c0_i32, %c0_i32_0 : i32, i32
  }
  func.func @transform_6(%arg0: i32) -> (i32, i32) {
    %c0_i32 = arith.constant 0 : i32
    %c0_i32_0 = arith.constant 0 : i32
    %c0_i32_1 = arith.constant 0 : i32
    return %c0_i32, %c0_i32_0 : i32, i32
  }
  func.func @transform_7(%arg0: i32) -> (i32, i32) {
    %c0_i32 = arith.constant 0 : i32
    %c0_i32_0 = arith.constant 0 : i32
    return %arg0, %c0_i32 : i32, i32
  }
}

</mosaic_0001>

<llo_original>
// kernel: fwd.1
$region0: #{fwd.1}
  #allocation0 [shape = 'u32[]', space=smem, size = 0x4, offset = 0x4, fixed_abs, tag = 'smem constant byte address 0x4 - core index']
  #allocation1 [shape = 'u32[144,128]{1,0:T(1,128)}', space=vmem, size = 0x12000, scoped, tag = 'internal scratch']
  %s0 = inlined_call_operand.hbm [shape: f32[8,16], index: 0, kind: input, shape index: {}]
  %s1 = inlined_call_operand.hbm [shape: f32[16,128], index: 1, kind: input, shape index: {}]
  %s2 = inlined_call_operand.vmem [shape: f32[1,128], index: 2, kind: input, shape index: {}]
  %s3 = inlined_call_operand.hbm [shape: f32[128,128], index: 3, kind: input, shape index: {}]
  %s4 = inlined_call_operand.vmem [shape: f32[1,128], index: 4, kind: input, shape index: {}]
  %s5 = inlined_call_operand.hbm [shape: f32[128,128], index: 5, kind: input, shape index: {}]
  %s6 = inlined_call_operand.vmem [shape: f32[1,128], index: 6, kind: input, shape index: {}]
  %s7 = inlined_call_operand.hbm [shape: f32[8,6], index: 7, kind: output, shape index: {}]
  %s8 = sld [smem:[#allocation0]]
  $region54: #{fwd.1} parent=0
    _
  %s10 = ssub.s32 1, %s8
  %s11 = scalar_select 0, %s10, %s8
  $region1: #{fwd.1} parent=0
    #allocation2 [shape = 'u8[4096]{0}', space=vmem, size = 0x1000, scoped, tag = 'input window, operand 0, single buffered']
    #allocation3 [shape = 's32[1]{0}', space=sflag, size = 0x4, scoped, tag = 'scoped memory for fwd.1']
    #allocation4 [shape = 's32[1]{0}', space=sflag, size = 0x4, scoped, tag = 'scoped memory for fwd.1']
    #allocation5 [shape = 'u8[8192]{0}', space=vmem, size = 0x2000, scoped, tag = 'input window, operand 1, single buffered']
    #allocation6 [shape = 's32[1]{0}', space=sflag, size = 0x4, scoped, tag = 'scoped memory for fwd.1']
    #allocation7 [shape = 'u8[65536]{0}', space=vmem, size = 0x10000, scoped, tag = 'input window, operand 3, single buffered']
    #allocation8 [shape = 'u8[65536]{0}', space=vmem, size = 0x10000, scoped, tag = 'input window, operand 5, single buffered']
    #allocation9 [shape = 's32[1]{0}', space=sflag, size = 0x4, scoped, tag = 'scoped memory for fwd.1']
    #allocation10 [shape = 'u8[4096]{0}', space=vmem, size = 0x1000, scoped, tag = 'output window, operand 0, single buffered']
    %12 = vsyncpa [#allocation3], 0
    %13 = vsyncpa [#allocation6], 0
    %14 = vsyncpa [#allocation9], 0
    %15 = vsyncpa [#allocation4], 0
    // Predicated region
    $region2: #{fwd.1} parent=1 // pred_check
      _
    $region3: #{fwd.1} parent=1 // pred_check_branch
      %17 = sbr.rel (0) target = $region5
    $region4: #{fwd.1} parent=1 // pred_region
      %s19 = ssub.s32 128, 128
      %20 = vsyncadd [#allocation3], %s19
      %s22 = sshll.u32 [#allocation2], 4
      %s23 = int_to_ptr.vmem [resolvable:$true] %s22
      %25 = dma.hbm_to_vmem [thread:$0]  %s0, 128, %s23, [#allocation3]
    $region5: #{fwd.1} parent=1 // pred_fallthru
      _
    // Predicated region
    $region6: #{fwd.1} parent=1 // pred_check
      _
    $region7: #{fwd.1} parent=1 // pred_check_branch
      %27 = sbr.rel (0) target = $region9
    $region8: #{fwd.1} parent=1 // pred_region
      %s29 = ssub.s32 256, 256
      %30 = vsyncadd [#allocation6], %s29
      %s31 = sshll.u32 [#allocation5], 4
      %s32 = int_to_ptr.vmem [resolvable:$true] %s31
      %37 = dma.hbm_to_vmem [thread:$0]  %s1, 256, %s32, [#allocation6], 128, 128, 8
    $region9: #{fwd.1} parent=1 // pred_fallthru
      _
    // Predicated region
    $region10: #{fwd.1} parent=1 // pred_check
      _
    $region11: #{fwd.1} parent=1 // pred_check_branch
      %39 = sbr.rel (0) target = $region13
    $region12: #{fwd.1} parent=1 // pred_region
      _
    $region13: #{fwd.1} parent=1 // pred_fallthru
      _
    // Predicated region
    $region14: #{fwd.1} parent=1 // pred_check
      _
    $region15: #{fwd.1} parent=1 // pred_check_branch
      %41 = sbr.rel (0) target = $region17
    $region16: #{fwd.1} parent=1 // pred_region
      %s43 = ssub.s32 2048, 2048
      %44 = vsyncadd [#allocation6], %s43
      %s45 = sshll.u32 [#allocation7], 4
      %s46 = int_to_ptr.vmem [resolvable:$true] %s45
      %51 = dma.hbm_to_vmem [thread:$0]  %s3, 2048, %s46, [#allocation6], 128, 128, 8
    $region17: #{fwd.1} parent=1 // pred_fallthru
      _
    // Predicated region
    $region18: #{fwd.1} parent=1 // pred_check
      _
    $region19: #{fwd.1} parent=1 // pred_check_branch
      %53 = sbr.rel (0) target = $region21
    $region20: #{fwd.1} parent=1 // pred_region
      _
    $region21: #{fwd.1} parent=1 // pred_fallthru
      _
    // Predicated region
    $region22: #{fwd.1} parent=1 // pred_check
      _
    $region23: #{fwd.1} parent=1 // pred_check_branch
      %55 = sbr.rel (0) target = $region25
    $region24: #{fwd.1} parent=1 // pred_region
      %s57 = ssub.s32 2048, 2048
      %58 = vsyncadd [#allocation9], %s57
      %s59 = sshll.u32 [#allocation8], 4
      %s60 = int_to_ptr.vmem [resolvable:$true] %s59
      %65 = dma.hbm_to_vmem [thread:$0]  %s5, 2048, %s60, [#allocation9], 128, 128, 8
    $region25: #{fwd.1} parent=1 // pred_fallthru
      _
    // Predicated region
    $region26: #{fwd.1} parent=1 // pred_check
      _
    $region27: #{fwd.1} parent=1 // pred_check_branch
      %67 = sbr.rel (0) target = $region29
    $region28: #{fwd.1} parent=1 // pred_region
      _
    $region29: #{fwd.1} parent=1 // pred_fallthru
      _
    // Predicated region
    $region30: #{fwd.1} parent=1 // pred_check
      _
    $region31: #{fwd.1} parent=1 // pred_check_branch
      %69 = sbr.rel (0) target = $region33
    $region32: #{fwd.1} parent=1 // pred_region
      %70 = dma.done [#allocation3], 128
    $region33: #{fwd.1} parent=1 // pred_fallthru
      _
    // Predicated region
    $region34: #{fwd.1} parent=1 // pred_check
      _
    $region35: #{fwd.1} parent=1 // pred_check_branch
      %72 = sbr.rel (0) target = $region37
    $region36: #{fwd.1} parent=1 // pred_region
      %73 = dma.done [#allocation6], 256
    $region37: #{fwd.1} parent=1 // pred_fallthru
      _
    // Predicated region
    $region38: #{fwd.1} parent=1 // pred_check
      _
    $region39: #{fwd.1} parent=1 // pred_check_branch
      %75 = sbr.rel (0) target = $region41
    $region40: #{fwd.1} parent=1 // pred_region
      %76 = dma.done [#allocation6], 2048
    $region41: #{fwd.1} parent=1 // pred_fallthru
      _
    // Predicated region
    $region42: #{fwd.1} parent=1 // pred_check
      _
    $region43: #{fwd.1} parent=1 // pred_check_branch
      %78 = sbr.rel (0) target = $region45
    $region44: #{fwd.1} parent=1 // pred_region
      %79 = dma.done [#allocation9], 2048
    $region45: #{fwd.1} parent=1 // pred_fallthru
      _
    %v80 = vld [vmem:[#allocation2] sm:$0xff]
    %v81 = vld [vmem:[#allocation5] sm:$0xff]
    %v82 = vld [vmem:[#allocation5 + $0x8] sm:$0xff]
    %v83 = vld [vmem:[%s2] sm:$0x1]
    %v85 = vlaneseq
    %v86 = vshrl.u32 %v85, 7
    %v87 = vsub.s32 0, %v86
    %v88 = vrot.slane %v83, %v87
    %vm90 = vcmask 130048
    %v92 = vsel %vm90, %v80, 0
    %94 = vmatprep.subr.mxu0 0.0
    %95 = vmatpush1.msra.mxu0 %v81
    %96 = vmatprep.subr.mxu0 0.0
    %97 = vmatpush1.msra.mxu0 %v82
    %98 = vmatprep.subr.mxu0 0.0
    %99 = vmatpush1.msra.mxu0 0.0
    %100 = vmatprep.subr.mxu0 0.0
    %101 = vmatpush1.msra.mxu0 0.0
    %102 = vmatprep.subr.mxu0 0.0
    %103 = vmatpush1.msra.mxu0 0.0
    %104 = vmatprep.subr.mxu0 0.0
    %105 = vmatpush1.msra.mxu0 0.0
    %106 = vmatprep.subr.mxu0 0.0
    %107 = vmatpush1.msra.mxu0 0.0
    %108 = vmatprep.subr.mxu0 0.0
    %109 = vmatpush1.msra.mxu0 0.0
    %110 = vmatprep.subr.mxu0 0.0
    %111 = vmatpush1.msra.mxu0 0.0
    %112 = vmatprep.subr.mxu0 0.0
    %113 = vmatpush1.msra.mxu0 0.0
    %114 = vmatprep.subr.mxu0 0.0
    %115 = vmatpush1.msra.mxu0 0.0
    %116 = vmatprep.subr.mxu0 0.0
    %117 = vmatpush1.msra.mxu0 0.0
    %118 = vmatprep.subr.mxu0 0.0
    %119 = vmatpush1.msra.mxu0 0.0
    %120 = vmatprep.subr.mxu0 0.0
    %121 = vmatpush1.msra.mxu0 0.0
    %122 = vmatprep.subr.mxu0 0.0
    %123 = vmatpush1.msra.mxu0 0.0
    %124 = vmatprep.subr.mxu0 0.0
    %125 = vmatpush1.msra.mxu0 0.0
    %126 = vmatprep.subr.mxu0 0.0
    %127 = vmatpush1.msra.mxu0 0.0
    %128 = vmatprep.subr.mxu0 0.0
    %129 = vmatpush1.msra.mxu0 0.0
    %130 = vmatprep.subr.mxu0 0.0
    %131 = vmatpush1.msra.mxu0 0.0
    %132 = vmatprep.subr.mxu0 0.0
    %133 = vmatpush1.msra.mxu0 0.0
    %134 = vmatprep.subr.mxu0 0.0
    %135 = vmatpush1.msra.mxu0 0.0
    %136 = vmatprep.subr.mxu0 0.0
    %137 = vmatpush1.msra.mxu0 0.0
    %138 = vmatprep.subr.mxu0 0.0
    %139 = vmatpush1.msra.mxu0 0.0
    %140 = vmatprep.subr.mxu0 0.0
    %141 = vmatpush1.msra.mxu0 0.0
    %142 = vmatprep.subr.mxu0 0.0
    %143 = vmatpush1.msra.mxu0 0.0
    %144 = vmatprep.subr.mxu0 0.0
    %145 = vmatpush1.msra.mxu0 0.0
    %146 = vmatprep.subr.mxu0 0.0
    %147 = vmatpush1.msra.mxu0 0.0
    %148 = vmatprep.subr.mxu0 0.0
    %149 = vmatpush1.msra.mxu0 0.0
    %150 = vmatprep.subr.mxu0 0.0
    %151 = vmatpush1.msra.mxu0 0.0
    %152 = vmatprep.subr.mxu0 0.0
    %153 = vmatpush1.msra.mxu0 0.0
    %154 = vmatprep.subr.mxu0 0.0
    %155 = vmatpush1.msra.mxu0 0.0
    %156 = vmatprep.subr.mxu0 0.0
    %157 = vmatpush1.msra.mxu0 0.0
    %158 = vmatprep.mubr.f32.mxu0 0.0
    %159 = vmatmul.mubr.f32.gmra.mrb[0].mxu0 %v92
    %v160 = vpop.f32.mrb[0].mxu0
    %v161 = vadd.f32 %v88, %v160
    %v162 = vpop.f32.mrb[0].mxu0
    %163 = vdwg.mxu0
    %v164 = vtanh.pop %v161
    %v165 = vld [vmem:[#allocation7] sm:$0xff]
    %v166 = vld [vmem:[#allocation7 + $0x8] sm:$0xff]
    %v167 = vld [vmem:[#allocation7 + $0x10] sm:$0xff]
    %v168 = vld [vmem:[#allocation7 + $0x18] sm:$0xff]
    %v169 = vld [vmem:[#allocation7 + $0x20] sm:$0xff]
    %v170 = vld [vmem:[#allocation7 + $0x28] sm:$0xff]
    %v171 = vld [vmem:[#allocation7 + $0x30] sm:$0xff]
    %v172 = vld [vmem:[#allocation7 + $0x38] sm:$0xff]
    %v173 = vld [vmem:[#allocation7 + $0x40] sm:$0xff]
    %v174 = vld [vmem:[#allocation7 + $0x48] sm:$0xff]
    %v175 = vld [vmem:[#allocation7 + $0x50] sm:$0xff]
    %v176 = vld [vmem:[#allocation7 + $0x58] sm:$0xff]
    %v177 = vld [vmem:[#allocation7 + $0x60] sm:$0xff]
    %v178 = vld [vmem:[#allocation7 + $0x68] sm:$0xff]
    %v179 = vld [vmem:[#allocation7 + $0x70] sm:$0xff]
    %v180 = vld [vmem:[#allocation7 + $0x78] sm:$0xff]
    %v181 = vld [vmem:[%s4] sm:$0x1]
    %v183 = vlaneseq
    %v184 = vshrl.u32 %v183, 7
    %v185 = vsub.s32 0, %v184
    %v186 = vrot.slane %v181, %v185
    %188 = vmatprep.subr.mxu0 0.0
    %189 = vmatpush1.msra.mxu0 %v165
    %190 = vmatprep.subr.mxu0 0.0
    %191 = vmatpush1.msra.mxu0 %v166
    %192 = vmatprep.subr.mxu0 0.0
    %193 = vmatpush1.msra.mxu0 %v167
    %194 = vmatprep.subr.mxu0 0.0
    %195 = vmatpush1.msra.mxu0 %v168
    %196 = vmatprep.subr.mxu0 0.0
    %197 = vmatpush1.msra.mxu0 %v169
    %198 = vmatprep.subr.mxu0 0.0
    %199 = vmatpush1.msra.mxu0 %v170
    %200 = vmatprep.subr.mxu0 0.0
    %201 = vmatpush1.msra.mxu0 %v171
    %202 = vmatprep.subr.mxu0 0.0
    %203 = vmatpush1.msra.mxu0 %v172
    %204 = vmatprep.subr.mxu0 0.0
    %205 = vmatpush1.msra.mxu0 %v173
    %206 = vmatprep.subr.mxu0 0.0
    %207 = vmatpush1.msra.mxu0 %v174
    %208 = vmatprep.subr.mxu0 0.0
    %209 = vmatpush1.msra.mxu0 %v175
    %210 = vmatprep.subr.mxu0 0.0
    %211 = vmatpush1.msra.mxu0 %v176
    %212 = vmatprep.subr.mxu0 0.0
    %213 = vmatpush1.msra.mxu0 %v177
    %214 = vmatprep.subr.mxu0 0.0
    %215 = vmatpush1.msra.mxu0 %v178
    %216 = vmatprep.subr.mxu0 0.0
    %217 = vmatpush1.msra.mxu0 %v179
    %218 = vmatprep.subr.mxu0 0.0
    %219 = vmatpush1.msra.mxu0 %v180
    %220 = vmatprep.subr.mxu0 0.0
    %221 = vmatpush1.msra.mxu0 0.0
    %222 = vmatprep.subr.mxu0 0.0
    %223 = vmatpush1.msra.mxu0 0.0
    %224 = vmatprep.subr.mxu0 0.0
    %225 = vmatpush1.msra.mxu0 0.0
    %226 = vmatprep.subr.mxu0 0.0
    %227 = vmatpush1.msra.mxu0 0.0
    %228 = vmatprep.subr.mxu0 0.0
    %229 = vmatpush1.msra.mxu0 0.0
    %230 = vmatprep.subr.mxu0 0.0
    %231 = vmatpush1.msra.mxu0 0.0
    %232 = vmatprep.subr.mxu0 0.0
    %233 = vmatpush1.msra.mxu0 0.0
    %234 = vmatprep.subr.mxu0 0.0
    %235 = vmatpush1.msra.mxu0 0.0
    %236 = vmatprep.subr.mxu0 0.0
    %237 = vmatpush1.msra.mxu0 0.0
    %238 = vmatprep.subr.mxu0 0.0
    %239 = vmatpush1.msra.mxu0 0.0
    %240 = vmatprep.subr.mxu0 0.0
    %241 = vmatpush1.msra.mxu0 0.0
    %242 = vmatprep.subr.mxu0 0.0
    %243 = vmatpush1.msra.mxu0 0.0
    %244 = vmatprep.subr.mxu0 0.0
    %245 = vmatpush1.msra.mxu0 0.0
    %246 = vmatprep.subr.mxu0 0.0
    %247 = vmatpush1.msra.mxu0 0.0
    %248 = vmatprep.subr.mxu0 0.0
    %249 = vmatpush1.msra.mxu0 0.0
    %250 = vmatprep.subr.mxu0 0.0
    %251 = vmatpush1.msra.mxu0 0.0
    %252 = vmatprep.mubr.f32.mxu0 0.0
    %253 = vmatmul.mubr.f32.gmra.mrb[0].mxu0 %v164
    %v254 = vpop.f32.mrb[0].mxu0
    %v255 = vadd.f32 %v186, %v254
    %v256 = vpop.f32.mrb[0].mxu0
    %257 = vdwg.mxu0
    %v258 = vtanh.pop %v255
    %v259 = vld [vmem:[#allocation8] sm:$0xff]
    %v260 = vld [vmem:[#allocation8 + $0x8] sm:$0xff]
    %v261 = vld [vmem:[#allocation8 + $0x10] sm:$0xff]
    %v262 = vld [vmem:[#allocation8 + $0x18] sm:$0xff]
    %v263 = vld [vmem:[#allocation8 + $0x20] sm:$0xff]
    %v264 = vld [vmem:[#allocation8 + $0x28] sm:$0xff]
    %v265 = vld [vmem:[#allocation8 + $0x30] sm:$0xff]
    %v266 = vld [vmem:[#allocation8 + $0x38] sm:$0xff]
    %v267 = vld [vmem:[#allocation8 + $0x40] sm:$0xff]
    %v268 = vld [vmem:[#allocation8 + $0x48] sm:$0xff]
    %v269 = vld [vmem:[#allocation8 + $0x50] sm:$0xff]
    %v270 = vld [vmem:[#allocation8 + $0x58] sm:$0xff]
    %v271 = vld [vmem:[#allocation8 + $0x60] sm:$0xff]
    %v272 = vld [vmem:[#allocation8 + $0x68] sm:$0xff]
    %v273 = vld [vmem:[#allocation8 + $0x70] sm:$0xff]
    %v274 = vld [vmem:[#allocation8 + $0x78] sm:$0xff]
    %v275 = vld [vmem:[%s6] sm:$0x1]
    %v277 = vlaneseq
    %v278 = vshrl.u32 %v277, 7
    %v279 = vsub.s32 0, %v278
    %v280 = vrot.slane %v275, %v279
    %282 = vmatprep.subr.mxu0 0.0
    %283 = vmatpush1.msra.mxu0 %v259
    %284 = vmatprep.subr.mxu0 0.0
    %285 = vmatpush1.msra.mxu0 %v260
    %286 = vmatprep.subr.mxu0 0.0
    %287 = vmatpush1.msra.mxu0 %v261
    %288 = vmatprep.subr.mxu0 0.0
    %289 = vmatpush1.msra.mxu0 %v262
    %290 = vmatprep.subr.mxu0 0.0
    %291 = vmatpush1.msra.mxu0 %v263
    %292 = vmatprep.subr.mxu0 0.0
    %293 = vmatpush1.msra.mxu0 %v264
    %294 = vmatprep.subr.mxu0 0.0
    %295 = vmatpush1.msra.mxu0 %v265
    %296 = vmatprep.subr.mxu0 0.0
    %297 = vmatpush1.msra.mxu0 %v266
    %298 = vmatprep.subr.mxu0 0.0
    %299 = vmatpush1.msra.mxu0 %v267
    %300 = vmatprep.subr.mxu0 0.0
    %301 = vmatpush1.msra.mxu0 %v268
    %302 = vmatprep.subr.mxu0 0.0
    %303 = vmatpush1.msra.mxu0 %v269
    %304 = vmatprep.subr.mxu0 0.0
    %305 = vmatpush1.msra.mxu0 %v270
    %306 = vmatprep.subr.mxu0 0.0
    %307 = vmatpush1.msra.mxu0 %v271
    %308 = vmatprep.subr.mxu0 0.0
    %309 = vmatpush1.msra.mxu0 %v272
    %310 = vmatprep.subr.mxu0 0.0
    %311 = vmatpush1.msra.mxu0 %v273
    %312 = vmatprep.subr.mxu0 0.0
    %313 = vmatpush1.msra.mxu0 %v274
    %314 = vmatprep.subr.mxu0 0.0
    %315 = vmatpush1.msra.mxu0 0.0
    %316 = vmatprep.subr.mxu0 0.0
    %317 = vmatpush1.msra.mxu0 0.0
    %318 = vmatprep.subr.mxu0 0.0
    %319 = vmatpush1.msra.mxu0 0.0
    %320 = vmatprep.subr.mxu0 0.0
    %321 = vmatpush1.msra.mxu0 0.0
    %322 = vmatprep.subr.mxu0 0.0
    %323 = vmatpush1.msra.mxu0 0.0
    %324 = vmatprep.subr.mxu0 0.0
    %325 = vmatpush1.msra.mxu0 0.0
    %326 = vmatprep.subr.mxu0 0.0
    %327 = vmatpush1.msra.mxu0 0.0
    %328 = vmatprep.subr.mxu0 0.0
    %329 = vmatpush1.msra.mxu0 0.0
    %330 = vmatprep.subr.mxu0 0.0
    %331 = vmatpush1.msra.mxu0 0.0
    %332 = vmatprep.subr.mxu0 0.0
    %333 = vmatpush1.msra.mxu0 0.0
    %334 = vmatprep.subr.mxu0 0.0
    %335 = vmatpush1.msra.mxu0 0.0
    %336 = vmatprep.subr.mxu0 0.0
    %337 = vmatpush1.msra.mxu0 0.0
    %338 = vmatprep.subr.mxu0 0.0
    %339 = vmatpush1.msra.mxu0 0.0
    %340 = vmatprep.subr.mxu0 0.0
    %341 = vmatpush1.msra.mxu0 0.0
    %342 = vmatprep.subr.mxu0 0.0
    %343 = vmatpush1.msra.mxu0 0.0
    %344 = vmatprep.subr.mxu0 0.0
    %345 = vmatpush1.msra.mxu0 0.0
    %346 = vmatprep.mubr.f32.mxu0 0.0
    %347 = vmatmul.mubr.f32.gmra.mrb[0].mxu0 %v258
    %v348 = vpop.f32.mrb[0].mxu0
    %v349 = vadd.f32 %v280, %v348
    %v350 = vpop.f32.mrb[0].mxu0
    %351 = vdwg.mxu0
    %352 = vmax.xlane.f32.xlu0 %v349
    %v353 = vpop.xlane.xlu0 %352
    %v354 = vsub.f32 %v349, %v353
    %v355 = vmul.f32 %v354, 1.442695
    %v356 = vpow.pop %v355
    %357 = vadd.xlane.f32.xlu0 %v356
    %v358 = vpop.xlane.xlu0 %357
    %v359 = vlog2.pop %v358
    %v360 = vmul.f32 %v359, 0.6931472
    %v361 = vsub.f32 %v354, %v360
    %vm362 = vcmask 48128
    %363 = vst.msk [vmem:[#allocation10] sm:$0xff] %vm362, %v361
    // Predicated region
    $region46: #{fwd.1} parent=1 // pred_check
      _
    $region47: #{fwd.1} parent=1 // pred_check_branch
      %365 = sbr.rel (0) target = $region49
    $region48: #{fwd.1} parent=1 // pred_region
      %s367 = ssub.s32 128, 128
      %368 = vsyncadd [#allocation4], %s367
      %s370 = sshll.u32 [#allocation10], 4
      %s371 = int_to_ptr.vmem [resolvable:$true] %s370
      %373 = dma.vmem_to_hbm [thread:$0]  %s371, 128, %s7, [#allocation4]
    $region49: #{fwd.1} parent=1 // pred_fallthru
      _
    // Predicated region
    $region50: #{fwd.1} parent=1 // pred_check
      _
    $region51: #{fwd.1} parent=1 // pred_check_branch
      %375 = sbr.rel (0) target = $region53
    $region52: #{fwd.1} parent=1 // pred_region
      %376 = dma.done [#allocation4], 128
    $region53: #{fwd.1} parent=1 // pred_fallthru
      _
    %377 = vsyncpa [#allocation3], 1
    %378 = vsyncpa [#allocation6], 1
    %379 = vsyncpa [#allocation9], 1
    %380 = vsyncpa [#allocation4], 1

</llo_original>
